<compile_context>
chip_gen: v7x
topology: tpu7x:2x2x1
jax: 0.10.0
libtpu: 0.0.40
codegen_flags: <defaults>
</compile_context>

<pallas_src>
import functools

import jax
import jax.numpy as jnp
from jax.experimental import pallas as pl
from jax.experimental.pallas import tpu as pltpu


def _dsconv_kernel(x_ref, wf_ref, bf_ref, o_ref, *, KH, KW, stride, TH, Wout):
    # x_ref  : (1, Cin, Hp, Wp)    zero-padded input image (one batch element)
    # wf_ref : (Cout, KH*KW*Cin)   fused (depthwise x pointwise) weight
    # bf_ref : (Cout, 1)           fused bias (f32)
    # o_ref  : (1, Cout, TH*Wout)  lane-dense output tile (row tile, flat spatial)
    t = pl.program_id(1)
    row0 = pl.multiple_of(t * (TH * stride), TH * stride)   # first padded input row
    rows = (TH - 1) * stride + 1                            # input rows needed per tile
    cols = (Wout - 1) * stride + 1                          # input cols needed per row
    M = TH * Wout

    # im2col: gather the KH*KW shifted windows; each is (Cin, TH, Wout).
    patches = []
    for kh in range(KH):
        win = x_ref[0, :, pl.ds(row0 + kh, rows), :]        # (Cin, rows, Wp)
        if stride > 1:
            win = win[:, ::stride, :]                       # (Cin, TH, Wp)
        for kw in range(KW):
            if stride > 1:
                patches.append(win[:, :, kw:kw + cols:stride])
            else:
                patches.append(win[:, :, kw:kw + Wout])
    col = jnp.concatenate(patches, axis=0)                  # (KH*KW*Cin, TH, Wout)
    col = col.reshape(col.shape[0], M)                      # (KH*KW*Cin, M)

    # Single MXU matmul: (Cout, K) @ (K, M) -> (Cout, M), f32 accumulation.
    out = jnp.dot(wf_ref[...], col, preferred_element_type=jnp.float32)
    out = out + bf_ref[...]                                 # (Cout, 1) broadcast over lanes
    o_ref[0] = out.astype(o_ref.dtype)


def _pick_row_tile(Hout, Wout):
    # Smallest divisor TH of Hout whose flattened tile TH*Wout is lane-dense
    # (a multiple of 128) and of modest size; otherwise fall back to the full image.
    for th in range(1, Hout + 1):
        if Hout % th == 0 and (th * Wout) % 128 == 0 and th * Wout <= 8192:
            return th
    return Hout


def depth_separable_conv2d(x_nchw, w_dw, b_dw, w_pw, b_pw, *, stride=1, padding=0):
    """Forward of DepthSeparableConv2d.

    x_nchw : (N, Cin, H, W)
    w_dw   : (Cin, 1, KH, KW)   -- torch depthwise Conv2d weight (groups=Cin)
    b_dw   : (Cin,)
    w_pw   : (Cout, Cin, 1, 1)  -- torch pointwise Conv2d weight
    b_pw   : (Cout,)
    returns: (N, Cout, Hout, Wout)
    """
    N, Cin, H, W = x_nchw.shape
    KH, KW = int(w_dw.shape[2]), int(w_dw.shape[3])
    Cout = int(w_pw.shape[0])
    Hout = (H + 2 * padding - KH) // stride + 1
    Wout = (W + 2 * padding - KW) // stride + 1

    # TODO(synk): for large paddings/resolutions, handle the halo in-kernel (masked
    # taps) instead of materializing a zero-padded activation copy in HBM.
    x_pad = jnp.pad(x_nchw, ((0, 0), (0, 0), (padding, padding), (padding, padding)))
    Hp, Wp = H + 2 * padding, W + 2 * padding

    # Fuse depthwise into pointwise (done once in the wrapper, not per grid step):
    #   Wf[co, (kh*KW + kw)*Cin + ci] = w_pw[co, ci] * w_dw[ci, kh, kw]
    #   bf[co] = b_pw[co] + sum_ci w_pw[co, ci] * b_dw[ci]
    wdw = w_dw[:, 0, :, :].astype(jnp.float32)                        # (Cin, KH, KW)
    wpw = w_pw[:, :, 0, 0].astype(jnp.float32)                        # (Cout, Cin)
    wf = wpw[:, None, None, :] * jnp.transpose(wdw, (1, 2, 0))[None]  # (Cout, KH, KW, Cin)
    wf = wf.reshape(Cout, KH * KW * Cin).astype(x_nchw.dtype)
    bf = (b_pw.astype(jnp.float32) + wpw @ b_dw.astype(jnp.float32)).reshape(Cout, 1)

    TH = _pick_row_tile(Hout, Wout)
    T = Hout // TH
    M = TH * Wout
    K = KH * KW * Cin

    kernel = functools.partial(_dsconv_kernel, KH=KH, KW=KW, stride=stride,
                               TH=TH, Wout=Wout)

    out_flat = pl.pallas_call(
        kernel,
        out_shape=jax.ShapeDtypeStruct((N, Cout, Hout * Wout), x_nchw.dtype),
        grid_spec=pltpu.PrefetchScalarGridSpec(
            num_scalar_prefetch=0,
            grid=(N, T),
            in_specs=[
                # Whole padded image per batch element; index map ignores the row
                # tile so the input DMA only fires when the batch index changes.
                pl.BlockSpec((1, Cin, Hp, Wp), lambda n, t: (n, 0, 0, 0)),
                pl.BlockSpec((Cout, K), lambda n, t: (0, 0)),
                pl.BlockSpec((Cout, 1), lambda n, t: (0, 0)),
            ],
            out_specs=pl.BlockSpec((1, Cout, M), lambda n, t: (n, 0, t)),
        ),
        compiler_params=pltpu.CompilerParams(
            dimension_semantics=("parallel", "parallel")),
    )(x_pad, wf, bf)

    # (N, Cout, Hout*Wout) -> (N, Cout, Hout, Wout): pure reshape, no transpose.
    return out_flat.reshape(N, Cout, Hout, Wout)


def _reference(x, w_dw, b_dw, w_pw, b_pw, stride, padding):
    # Pure-JAX reference matching torch.nn.Conv2d semantics.
    dw = jax.lax.conv_general_dilated(
        x, w_dw, window_strides=(stride, stride),
        padding=[(padding, padding), (padding, padding)],
        dimension_numbers=('NCHW', 'OIHW', 'NCHW'),
        feature_group_count=x.shape[1])
    dw = dw + b_dw.reshape(1, -1, 1, 1)
    pw = jax.lax.conv_general_dilated(
        dw, w_pw, window_strides=(1, 1), padding=[(0, 0), (0, 0)],
        dimension_numbers=('NCHW', 'OIHW', 'NCHW'))
    return pw + b_pw.reshape(1, -1, 1, 1)


if __name__ == "__main__":
    # Small, deterministic synthetic config (mirrors the module's __init__ shapes).
    N, Cin, Cout, H, W = 2, 4, 8, 16, 16
    K, stride, padding = 3, 1, 1

    key = jax.random.PRNGKey(0)
    k0, k1, k2, k3, k4 = jax.random.split(key, 5)
    x = jax.random.normal(k0, (N, Cin, H, W), dtype=jnp.float32)
    w_dw = jax.random.normal(k1, (Cin, 1, K, K), dtype=jnp.float32) * 0.1
    b_dw = jax.random.normal(k2, (Cin,), dtype=jnp.float32) * 0.1
    w_pw = jax.random.normal(k3, (Cout, Cin, 1, 1), dtype=jnp.float32) * 0.1
    b_pw = jax.random.normal(k4, (Cout,), dtype=jnp.float32) * 0.1

    out = depth_separable_conv2d(x, w_dw, b_dw, w_pw, b_pw,
                                 stride=stride, padding=padding)
    out = jax.block_until_ready(out)

    ref = _reference(x, w_dw, b_dw, w_pw, b_pw, stride, padding)
    assert out.shape == (N, Cout, H, W), out.shape
    assert jnp.allclose(out, ref, atol=1e-4, rtol=1e-4), \
        float(jnp.max(jnp.abs(out - ref)))
    print("KERNEL_OK")
</pallas_src>

<mosaic_0001>
module attributes {stable_mosaic.version = 11 : i64} {
  func.func @_dsconv_kernel(%arg0: i32, %arg1: i32, %arg2: memref<1x4x18x18xf32, #tpu.memory_space<vmem>>, %arg3: memref<8x36xf32, #tpu.memory_space<vmem>>, %arg4: memref<8x1xf32, #tpu.memory_space<vmem>>, %arg5: memref<1x8x128xf32, #tpu.memory_space<vmem>>) attributes {dimension_semantics = [#tpu.dimension_semantics<parallel>, #tpu.dimension_semantics<parallel>], iteration_bounds = array<i64: 2, 2>, scalar_prefetch = 0 : i64, scratch_operands = 0 : i64, tpu.core_type = #tpu.core_type<tc>, window_params = [{transform_indices = @transform_0, window_bounds = array<i64: 1, 4, 18, 18>}, {pipeline_mode = #tpu.pipeline_mode<synchronous>, transform_indices = @transform_1, window_bounds = array<i64: 8, 36>}, {pipeline_mode = #tpu.pipeline_mode<synchronous>, transform_indices = @transform_2, window_bounds = array<i64: 8, 1>}, {transform_indices = @transform_3, window_bounds = array<i64: 1, 8, 128>}]} {
    %c8_i32 = arith.constant 8 : i32
    %0 = arith.muli %arg1, %c8_i32 : i32
    %1 = tpu.assume_multiple %0, 8 : i32
    %c0_i32 = arith.constant 0 : i32
    %2 = arith.addi %1, %c0_i32 : i32
    %c0 = arith.constant 0 : index
    %c0_0 = arith.constant 0 : index
    %3 = arith.index_cast %2 : i32 to index
    %c0_1 = arith.constant 0 : index
    %4 = vector.load %arg2[%c0, %c0_0, %3, %c0_1] : memref<1x4x18x18xf32, #tpu.memory_space<vmem>>, vector<1x4x8x18xf32>
    %5 = vector.shape_cast %4 : vector<1x4x8x18xf32> to vector<4x8x18xf32>
    %6 = vector.extract_strided_slice %5 {offsets = [0, 0, 0], sizes = [4, 8, 16], strides = [1, 1, 1]} : vector<4x8x18xf32> to vector<4x8x16xf32>
    %7 = vector.extract_strided_slice %5 {offsets = [0, 0, 1], sizes = [4, 8, 16], strides = [1, 1, 1]} : vector<4x8x18xf32> to vector<4x8x16xf32>
    %8 = vector.extract_strided_slice %5 {offsets = [0, 0, 2], sizes = [4, 8, 16], strides = [1, 1, 1]} : vector<4x8x18xf32> to vector<4x8x16xf32>
    %c1_i32 = arith.constant 1 : i32
    %9 = arith.addi %1, %c1_i32 : i32
    %c0_2 = arith.constant 0 : index
    %c0_3 = arith.constant 0 : index
    %10 = arith.index_cast %9 : i32 to index
    %c0_4 = arith.constant 0 : index
    %11 = vector.load %arg2[%c0_2, %c0_3, %10, %c0_4] : memref<1x4x18x18xf32, #tpu.memory_space<vmem>>, vector<1x4x8x18xf32>
    %12 = vector.shape_cast %11 : vector<1x4x8x18xf32> to vector<4x8x18xf32>
    %13 = vector.extract_strided_slice %12 {offsets = [0, 0, 0], sizes = [4, 8, 16], strides = [1, 1, 1]} : vector<4x8x18xf32> to vector<4x8x16xf32>
    %14 = vector.extract_strided_slice %12 {offsets = [0, 0, 1], sizes = [4, 8, 16], strides = [1, 1, 1]} : vector<4x8x18xf32> to vector<4x8x16xf32>
    %15 = vector.extract_strided_slice %12 {offsets = [0, 0, 2], sizes = [4, 8, 16], strides = [1, 1, 1]} : vector<4x8x18xf32> to vector<4x8x16xf32>
    %c2_i32 = arith.constant 2 : i32
    %16 = arith.addi %1, %c2_i32 : i32
    %c0_5 = arith.constant 0 : index
    %c0_6 = arith.constant 0 : index
    %17 = arith.index_cast %16 : i32 to index
    %c0_7 = arith.constant 0 : index
    %18 = vector.load %arg2[%c0_5, %c0_6, %17, %c0_7] : memref<1x4x18x18xf32, #tpu.memory_space<vmem>>, vector<1x4x8x18xf32>
    %19 = vector.shape_cast %18 : vector<1x4x8x18xf32> to vector<4x8x18xf32>
    %20 = vector.extract_strided_slice %19 {offsets = [0, 0, 0], sizes = [4, 8, 16], strides = [1, 1, 1]} : vector<4x8x18xf32> to vector<4x8x16xf32>
    %21 = vector.extract_strided_slice %19 {offsets = [0, 0, 1], sizes = [4, 8, 16], strides = [1, 1, 1]} : vector<4x8x18xf32> to vector<4x8x16xf32>
    %22 = vector.extract_strided_slice %19 {offsets = [0, 0, 2], sizes = [4, 8, 16], strides = [1, 1, 1]} : vector<4x8x18xf32> to vector<4x8x16xf32>
    %23 = tpu.concatenate %6, %7, %8, %13, %14, %15, %20, %21, %22 in 0 : vector<4x8x16xf32>, vector<4x8x16xf32>, vector<4x8x16xf32>, vector<4x8x16xf32>, vector<4x8x16xf32>, vector<4x8x16xf32>, vector<4x8x16xf32>, vector<4x8x16xf32>, vector<4x8x16xf32> -> vector<36x8x16xf32>
    %24 = vector.shape_cast %23 : vector<36x8x16xf32> to vector<36x128xf32>
    %c0_8 = arith.constant 0 : index
    %c0_9 = arith.constant 0 : index
    %25 = vector.load %arg3[%c0_8, %c0_9] : memref<8x36xf32, #tpu.memory_space<vmem>>, vector<8x36xf32>
    %cst = arith.constant dense<0.000000e+00> : vector<8x128xf32>
    %26 = tpu.matmul %25, %24, %cst {dimension_numbers = #tpu.dot_dimension_numbers<[1], [0], [0], [1], [0, 0, 1, 1], [], []>} : vector<8x36xf32>, vector<36x128xf32>, vector<8x128xf32> -> vector<8x128xf32>
    %c0_10 = arith.constant 0 : index
    %c0_11 = arith.constant 0 : index
    %27 = vector.load %arg4[%c0_10, %c0_11] : memref<8x1xf32, #tpu.memory_space<vmem>>, vector<8x1xf32>
    %28 = vector.broadcast %27 : vector<8x1xf32> to vector<8x128xf32>
    %29 = arith.addf %26, %28 : vector<8x128xf32>
    %c0_12 = arith.constant 0 : index
    %c0_13 = arith.constant 0 : index
    %c0_14 = arith.constant 0 : index
    %30 = vector.load %arg5[%c0_12, %c0_13, %c0_14] : memref<1x8x128xf32, #tpu.memory_space<vmem>>, vector<1x8x128xf32>
    %31 = vector.shape_cast %30 : vector<1x8x128xf32> to vector<8x128xf32>
    %32 = vector.shape_cast %29 : vector<8x128xf32> to vector<1x8x128xf32>
    tpu.vector_store %arg5[%c0_12, %c0_13, %c0_14], %32 {strides = array<i32>} : memref<1x8x128xf32, #tpu.memory_space<vmem>>, vector<1x8x128xf32>,
    return
  }
  func.func @transform_0(%arg0: i32, %arg1: i32) -> (i32, i32, i32, i32) {
    %c0_i32 = arith.constant 0 : i32
    %c0_i32_0 = arith.constant 0 : i32
    %c0_i32_1 = arith.constant 0 : i32
    %c0_i32_2 = arith.constant 0 : i32
    return %arg0, %c0_i32, %c0_i32_0, %c0_i32_1 : i32, i32, i32, i32
  }
  func.func @transform_1(%arg0: i32, %arg1: i32) -> (i32, i32) {
    %c0_i32 = arith.constant 0 : i32
    %c0_i32_0 = arith.constant 0 : i32
    %c0_i32_1 = arith.constant 0 : i32
    return %c0_i32, %c0_i32_0 : i32, i32
  }
  func.func @transform_2(%arg0: i32, %arg1: i32) -> (i32, i32) {
    %c0_i32 = arith.constant 0 : i32
    %c0_i32_0 = arith.constant 0 : i32
    %c0_i32_1 = arith.constant 0 : i32
    return %c0_i32, %c0_i32_0 : i32, i32
  }
  func.func @transform_3(%arg0: i32, %arg1: i32) -> (i32, i32, i32) {
    %c0_i32 = arith.constant 0 : i32
    %c0_i32_0 = arith.constant 0 : i32
    return %arg0, %c0_i32, %arg1 : i32, i32, i32
  }
}

</mosaic_0001>

<llo_original>
// kernel: tpu_custom_call.1
$region0: #{tpu_custom_call.1}
  #allocation0 [shape = 'u32[]', space=smem, size = 0x4, offset = 0x4, fixed_abs, tag = 'smem constant byte address 0x4 - core index']
  #allocation1 [shape = 'u32[144,128]{1,0:T(1,128)}', space=vmem, size = 0x12000, scoped, tag = 'internal scratch']
  %s0 = inlined_call_operand.vmem [shape: f32[2,4,18,18], index: 0, kind: input, shape index: {}]
  %s1 = inlined_call_operand.vmem [shape: f32[8,36], index: 1, kind: input, shape index: {}]
  %s2 = inlined_call_operand.vmem [shape: f32[8,1], index: 2, kind: input, shape index: {}]
  %s3 = inlined_call_operand.hbm [shape: f32[2,8,256], index: 3, kind: output, shape index: {}]
  %s4 = sld [smem:[#allocation0]]
  $region45: #{tpu_custom_call.1} parent=0
    _
  %s6 = ssub.s32 1, %s4
  %s7 = scalar_select 0, %s6, %s4
  $region1: #{tpu_custom_call.1} parent=0
    #allocation2 [shape = 'u8[8192]{0}', space=vmem, size = 0x2000, scoped, tag = 'output window, operand 0']
    #allocation3 [shape = 's32[2]{0}', space=sflag, size = 0x8, scoped, tag = 'scoped memory for tpu_custom_call.1']
    %8 = vsyncpa [#allocation3], 0
    %s9 = scalar_lea.sflag [#allocation3], 1
    %10 = vsyncpa %s9, 0
    loop: start=0, step=1, limit=6
    $region2: #{tpu_custom_call.1} parent=1 // loop_pre_header
      _
    $region3: #{tpu_custom_call.1} parent=1 // loop_header
      %s12 = sphi 0, %s16
      %p13 = scmp.ge.s32.totalorder %s12, 6
      %s19 = sphi 0, %s31
      %s20 = sphi 0, %s27
      %s21 = sphi 0, %s19
      %s22 = sphi 0, %s20
      %s23 = sphi 0, %s21
      %s24 = sphi 0, %s22
      %s34 = sphi 0, %s36
      %s37 = sphi 0, %s34
      %s38 = sphi 0, %s37
      %s54 = sphi 0, %s38
      %s58 = sphi 0, %s58
      %s60 = sphi 0, %s58
      %s61 = sphi 0, %s60
      %s75 = sphi 0, %s61
      %s79 = sphi 0, %s79
      %s81 = sphi 0, %s79
      %s82 = sphi 0, %s81
      %s96 = sphi 0, %s82
      %s104 = sphi 0, %s106
      %s107 = sphi 0, %s104
      %s108 = sphi 0, %s107
      %s124 = sphi 0, %s108
    $region4: #{tpu_custom_call.1} parent=1 // loop_header_branch
      %15 = sbr.rel (%p13) target = $region8
    $region5: #{tpu_custom_call.1} parent=1 // loop_body
      %s17 = ssub.s32 %s12, 1
      %s18 = ssub.s32 %s12, 2
      %s25 = sadd.s32 1, %s20
      %p26 = scmp.ge.s32.totalorder %s25, 2
      %s27 = scalar_select %p26, 0, %s25
      %s28 = sadd.s32 1, %s19
      %s29 = scalar_select %p26, %s28, %s19
      %p30 = scmp.ge.s32.totalorder %s29, 2
      %s31 = scalar_select %p30, 0, %s29
      %s32 = ssub.s32 %s19, %s31
      %p33 = scmp.eq.s32.totalorder %s32, 0
      %s35 = sadd.s32 %s34, 1
      %s36 = scalar_select %p33, %s34, %s35
      %p39 = pneg %p33
      %p40 = scmp.eq.s32.totalorder %s12, 3
      %p41 = por %p39, %p40
      %p42 = scmp.ne.s32.totalorder %s34, %s37
      %p43 = scmp.eq.s32.totalorder %s12, 0
      %p44 = por %p42, %p43
      %p45 = scmp.ne.s32.totalorder %s34, %s37
      %p46 = scmp.eq.s32.totalorder %s17, 3
      %p47 = por %p45, %p46
      %p48 = scmp.ne.s32.totalorder %s37, %s38
      %p49 = scmp.eq.s32.totalorder %s17, 0
      %p50 = por %p48, %p49
      %p51 = scmp.ne.s32.totalorder %s37, %s38
      %p52 = scmp.eq.s32.totalorder %s18, 3
      %p53 = por %p51, %p52
      %p55 = scmp.ne.s32.totalorder %s38, %s54
      %p56 = scmp.eq.s32.totalorder %s18, 0
      %p57 = por %p55, %p56
      %s59 = sadd.s32 %s58, 1
      %p62 = scmp.eq.s32.totalorder %s12, 3
      %p63 = scmp.ne.s32.totalorder %s58, %s60
      %p64 = scmp.eq.s32.totalorder %s12, 0
      %p65 = por %p63, %p64
      %p66 = scmp.ne.s32.totalorder %s58, %s60
      %p67 = scmp.eq.s32.totalorder %s17, 3
      %p68 = por %p66, %p67
      %p69 = scmp.ne.s32.totalorder %s60, %s61
      %p70 = scmp.eq.s32.totalorder %s17, 0
      %p71 = por %p69, %p70
      %p72 = scmp.ne.s32.totalorder %s60, %s61
      %p73 = scmp.eq.s32.totalorder %s18, 3
      %p74 = por %p72, %p73
      %p76 = scmp.ne.s32.totalorder %s61, %s75
      %p77 = scmp.eq.s32.totalorder %s18, 0
      %p78 = por %p76, %p77
      %s80 = sadd.s32 %s79, 1
      %p83 = scmp.eq.s32.totalorder %s12, 3
      %p84 = scmp.ne.s32.totalorder %s79, %s81
      %p85 = scmp.eq.s32.totalorder %s12, 0
      %p86 = por %p84, %p85
      %p87 = scmp.ne.s32.totalorder %s79, %s81
      %p88 = scmp.eq.s32.totalorder %s17, 3
      %p89 = por %p87, %p88
      %p90 = scmp.ne.s32.totalorder %s81, %s82
      %p91 = scmp.eq.s32.totalorder %s17, 0
      %p92 = por %p90, %p91
      %p93 = scmp.ne.s32.totalorder %s81, %s82
      %p94 = scmp.eq.s32.totalorder %s18, 3
      %p95 = por %p93, %p94
      %p97 = scmp.ne.s32.totalorder %s82, %s96
      %p98 = scmp.eq.s32.totalorder %s18, 0
      %p99 = por %p97, %p98
      %s100 = ssub.s32 %s19, %s31
      %s101 = ssub.s32 %s20, %s27
      %s102 = sor.u32 %s100, %s101
      %p103 = scmp.eq.s32.totalorder %s102, 0
      %s105 = sadd.s32 %s104, 1
      %s106 = scalar_select %p103, %s104, %s105
      %p109 = pneg %p103
      %p110 = scmp.eq.s32.totalorder %s12, 3
      %p111 = por %p109, %p110
      %p112 = scmp.ne.s32.totalorder %s104, %s107
      %p113 = scmp.eq.s32.totalorder %s12, 0
      %p114 = por %p112, %p113
      %p115 = scmp.ne.s32.totalorder %s104, %s107
      %p116 = scmp.eq.s32.totalorder %s17, 3
      %p117 = por %p115, %p116
      %p118 = scmp.ne.s32.totalorder %s107, %s108
      %p119 = scmp.eq.s32.totalorder %s17, 0
      %p120 = por %p118, %p119
      %p121 = scmp.ne.s32.totalorder %s107, %s108
      %p122 = scmp.eq.s32.totalorder %s18, 3
      %p123 = por %p121, %p122
      %p125 = scmp.ne.s32.totalorder %s108, %s124
      %p126 = scmp.eq.s32.totalorder %s18, 0
      %p127 = por %p125, %p126
      %p128 = scmp.le.s32.totalorder 1, %s12
      %p129 = scmp.lt.s32.totalorder %s12, 5
      %p130 = pnand %p128, %p129
      %p131 = pneg %p130
      // Predicated region
      $region9: #{tpu_custom_call.1} parent=5 // pred_check
        _
      $region10: #{tpu_custom_call.1} parent=5 // pred_check_branch
        %133 = sbr.rel (%p130) target = $region12
      $region11: #{tpu_custom_call.1} parent=5 // pred_region
        %s134 = ssub.s32 %s12, 1
        // Predicated region
        $region13: #{tpu_custom_call.1} parent=11 // pred_check
          %p135 = pneg %p71
        $region14: #{tpu_custom_call.1} parent=11 // pred_check_branch
          %137 = sbr.rel (%p135) target = $region16
        $region15: #{tpu_custom_call.1} parent=11 // pred_region
          _
        $region16: #{tpu_custom_call.1} parent=11 // pred_fallthru
          _
        // Predicated region
        $region17: #{tpu_custom_call.1} parent=11 // pred_check
          %p138 = pneg %p92
        $region18: #{tpu_custom_call.1} parent=11 // pred_check_branch
          %140 = sbr.rel (%p138) target = $region20
        $region19: #{tpu_custom_call.1} parent=11 // pred_region
          _
        $region20: #{tpu_custom_call.1} parent=11 // pred_fallthru
          _
      $region12: #{tpu_custom_call.1} parent=5 // pred_fallthru
        _
      %p141 = scmp.lt.s32.totalorder %s12, 4
      // Predicated region
      $region21: #{tpu_custom_call.1} parent=5 // pred_check
        %p142 = pneg %p141
      $region22: #{tpu_custom_call.1} parent=5 // pred_check_branch
        %144 = sbr.rel (%p142) target = $region24
      $region23: #{tpu_custom_call.1} parent=5 // pred_region
        // Predicated region
        $region25: #{tpu_custom_call.1} parent=23 // pred_check
          %p145 = pneg %p44
        $region26: #{tpu_custom_call.1} parent=23 // pred_check_branch
          %147 = sbr.rel (%p145) target = $region28
        $region27: #{tpu_custom_call.1} parent=23 // pred_region
          %p148 = scmp.lt.s32.totalorder %s19, 1
          %s149 = scalar_select %p148, %s19, 1
          %s150 = smul.addr %s149, 12
          %s151 = smul.addr %s150, 8
          %s152 = scalar_lea.vmem %s0, %s151
        $region28: #{tpu_custom_call.1} parent=23 // pred_fallthru
          _
      $region24: #{tpu_custom_call.1} parent=5 // pred_fallthru
        _
      %p153 = scmp.le.s32.totalorder 1, %s12
      %p154 = scmp.lt.s32.totalorder %s12, 5
      %p155 = pnand %p153, %p154
      %p156 = pneg %p155
      // Predicated region
      $region29: #{tpu_custom_call.1} parent=5 // pred_check
        _
      $region30: #{tpu_custom_call.1} parent=5 // pred_check_branch
        %158 = sbr.rel (%p155) target = $region32
      $region31: #{tpu_custom_call.1} parent=5 // pred_region
        %s159 = ssub.s32 %s12, 1
        %p160 = scmp.lt.s32.totalorder %s21, 1
        %s161 = scalar_select %p160, %s21, 1
        %s162 = smul.addr %s161, 12
        %s163 = smul.addr %s162, 8
        %s164 = scalar_lea.vmem %s0, %s163
        %p165 = pneg %p50
        %p166 = pneg %p47
        %p167 = pneg %p71
        %p168 = pneg %p68
        %p169 = pneg %p92
        %p170 = pneg %p89
        %p171 = pneg %p120
        %p172 = pneg %p117
        %s173 = sand.u32 %s107, 1
        %s174 = scalar_lea.sflag [#allocation3], %s173
        %s175 = sand.u32 %s107, 1
        %s176 = smul.addr %s175, 8
        %s177 = scalar_lea.vmem [#allocation2], %s176
        %p178 = scmp.lt.s32.totalorder %s21, 1
        %s179 = scalar_select %p178, %s21, 1
        %s180 = smul.addr %s179, 12
        %s181 = smul.addr %s180, 8
        %s182 = scalar_lea.vmem %s0, %s181
        %s183 = smul.u32 %s22, 8
        %s184 = scalar_lea.vmem %s182, %s183
        %v185 = vld [vmem:[%s184] sm:$0xff]
        %v186 = vld [vmem:[%s184 + $0x18] sm:$0xff]
        %v187 = vld [vmem:[%s184 + $0x30] sm:$0xff]
        %v188 = vld [vmem:[%s184 + $0x48] sm:$0xff]
        %s189 = sadd.s32 %s183, 1
        %s190 = scalar_lea.vmem %s182, %s189
        %v191 = vld [vmem:[%s190] sm:$0xff]
        %v192 = vld [vmem:[%s190 + $0x18] sm:$0xff]
        %v193 = vld [vmem:[%s190 + $0x30] sm:$0xff]
        %v194 = vld [vmem:[%s190 + $0x48] sm:$0xff]
        %s195 = sadd.s32 %s183, 2
        %s196 = scalar_lea.vmem %s182, %s195
        %v197 = vld [vmem:[%s196] sm:$0xff]
        %v198 = vld [vmem:[%s196 + $0x18] sm:$0xff]
        %v199 = vld [vmem:[%s196 + $0x30] sm:$0xff]
        %v200 = vld [vmem:[%s196 + $0x48] sm:$0xff]
        %205 = vrot.lane.b32.xlu0 %v185, 127
        %v206 = vpop.permute.xlu0 %205
        %207 = vrot.lane.b32.xlu0 %v186, 127
        %v208 = vpop.permute.xlu0 %207
        %209 = vrot.lane.b32.xlu0 %v187, 127
        %v210 = vpop.permute.xlu0 %209
        %211 = vrot.lane.b32.xlu0 %v188, 127
        %v212 = vpop.permute.xlu0 %211
        %217 = vrot.lane.b32.xlu0 %v185, 126
        %v218 = vpop.permute.xlu0 %217
        %219 = vrot.lane.b32.xlu0 %v186, 126
        %v220 = vpop.permute.xlu0 %219
        %221 = vrot.lane.b32.xlu0 %v187, 126
        %v222 = vpop.permute.xlu0 %221
        %223 = vrot.lane.b32.xlu0 %v188, 126
        %v224 = vpop.permute.xlu0 %223
        %233 = vrot.lane.b32.xlu0 %v191, 127
        %v234 = vpop.permute.xlu0 %233
        %235 = vrot.lane.b32.xlu0 %v192, 127
        %v236 = vpop.permute.xlu0 %235
        %237 = vrot.lane.b32.xlu0 %v193, 127
        %v238 = vpop.permute.xlu0 %237
        %239 = vrot.lane.b32.xlu0 %v194, 127
        %v240 = vpop.permute.xlu0 %239
        %245 = vrot.lane.b32.xlu0 %v191, 126
        %v246 = vpop.permute.xlu0 %245
        %247 = vrot.lane.b32.xlu0 %v192, 126
        %v248 = vpop.permute.xlu0 %247
        %249 = vrot.lane.b32.xlu0 %v193, 126
        %v250 = vpop.permute.xlu0 %249
        %251 = vrot.lane.b32.xlu0 %v194, 126
        %v252 = vpop.permute.xlu0 %251
        %261 = vrot.lane.b32.xlu0 %v197, 127
        %v262 = vpop.permute.xlu0 %261
        %263 = vrot.lane.b32.xlu0 %v198, 127
        %v264 = vpop.permute.xlu0 %263
        %265 = vrot.lane.b32.xlu0 %v199, 127
        %v266 = vpop.permute.xlu0 %265
        %267 = vrot.lane.b32.xlu0 %v200, 127
        %v268 = vpop.permute.xlu0 %267
        %273 = vrot.lane.b32.xlu0 %v197, 126
        %v274 = vpop.permute.xlu0 %273
        %275 = vrot.lane.b32.xlu0 %v198, 126
        %v276 = vpop.permute.xlu0 %275
        %277 = vrot.lane.b32.xlu0 %v199, 126
        %v278 = vpop.permute.xlu0 %277
        %279 = vrot.lane.b32.xlu0 %v200, 126
        %v280 = vpop.permute.xlu0 %279
        %v285 = vcombine.low %v185, %v187
        %v286 = vcombine.high %v185, %v187
        %v288 = vunpack.c.l.s4 1983009808
        %v289 = vunpack.c.0.s8 %v288
        %v290 = vlaneseq
        %v291 = vshrl.u32 %v290, 7
        %v292 = vsub.s32 %v289, %v291
        %v293 = vrot.slane %v285, %v292
        %v295 = vunpack.c.l.s4 1983009808
        %v296 = vunpack.c.0.s8 %v295
        %v297 = vlaneseq
        %v298 = vshrl.u32 %v297, 7
        %v299 = vsub.s32 %v296, %v298
        %v300 = vrot.slane %v286, %v299
        %v301 = vcombine.low %v186, %v188
        %v302 = vcombine.high %v186, %v188
        %v304 = vunpack.c.l.s4 1983009808
        %v305 = vunpack.c.0.s8 %v304
        %v306 = vlaneseq
        %v307 = vshrl.u32 %v306, 7
        %v308 = vsub.s32 %v305, %v307
        %v309 = vrot.slane %v301, %v308
        %v311 = vunpack.c.l.s4 1983009808
        %v312 = vunpack.c.0.s8 %v311
        %v313 = vlaneseq
        %v314 = vshrl.u32 %v313, 7
        %v315 = vsub.s32 %v312, %v314
        %v316 = vrot.slane %v302, %v315
        %v317 = vcombine.low %v206, %v210
        %v318 = vcombine.high %v206, %v210
        %v320 = vunpack.c.l.s4 1983009808
        %v321 = vunpack.c.0.s8 %v320
        %v322 = vlaneseq
        %v323 = vshrl.u32 %v322, 7
        %v324 = vsub.s32 %v321, %v323
        %v325 = vrot.slane %v317, %v324
        %v327 = vunpack.c.l.s4 1983009808
        %v328 = vunpack.c.0.s8 %v327
        %v329 = vlaneseq
        %v330 = vshrl.u32 %v329, 7
        %v331 = vsub.s32 %v328, %v330
        %v332 = vrot.slane %v318, %v331
        %v333 = vcombine.low %v208, %v212
        %v334 = vcombine.high %v208, %v212
        %v336 = vunpack.c.l.s4 1983009808
        %v337 = vunpack.c.0.s8 %v336
        %v338 = vlaneseq
        %v339 = vshrl.u32 %v338, 7
        %v340 = vsub.s32 %v337, %v339
        %v341 = vrot.slane %v333, %v340
        %v343 = vunpack.c.l.s4 1983009808
        %v344 = vunpack.c.0.s8 %v343
        %v345 = vlaneseq
        %v346 = vshrl.u32 %v345, 7
        %v347 = vsub.s32 %v344, %v346
        %v348 = vrot.slane %v334, %v347
        %v349 = vcombine.low %v293, %v309
        %v350 = vcombine.high %v293, %v309
        %v352 = vunpack.c.l.s4 1934713408
        %v353 = vunpack.c.0.s8 %v352
        %v354 = vlaneseq
        %v355 = vshrl.u32 %v354, 7
        %v356 = vsub.s32 %v353, %v355
        %v357 = vrot.slane %v349, %v356
        %v359 = vunpack.c.l.s4 1934713408
        %v360 = vunpack.c.0.s8 %v359
        %v361 = vlaneseq
        %v362 = vshrl.u32 %v361, 7
        %v363 = vsub.s32 %v360, %v362
        %v364 = vrot.slane %v350, %v363
        %v365 = vcombine.low %v300, %v316
        %v366 = vcombine.high %v300, %v316
        %v368 = vunpack.c.l.s4 1934713408
        %v369 = vunpack.c.0.s8 %v368
        %v370 = vlaneseq
        %v371 = vshrl.u32 %v370, 7
        %v372 = vsub.s32 %v369, %v371
        %v373 = vrot.slane %v365, %v372
        %v375 = vunpack.c.l.s4 1934713408
        %v376 = vunpack.c.0.s8 %v375
        %v377 = vlaneseq
        %v378 = vshrl.u32 %v377, 7
        %v379 = vsub.s32 %v376, %v378
        %v380 = vrot.slane %v366, %v379
        %v381 = vcombine.low %v325, %v341
        %v382 = vcombine.high %v325, %v341
        %v384 = vunpack.c.l.s4 1934713408
        %v385 = vunpack.c.0.s8 %v384
        %v386 = vlaneseq
        %v387 = vshrl.u32 %v386, 7
        %v388 = vsub.s32 %v385, %v387
        %v389 = vrot.slane %v381, %v388
        %v391 = vunpack.c.l.s4 1934713408
        %v392 = vunpack.c.0.s8 %v391
        %v393 = vlaneseq
        %v394 = vshrl.u32 %v393, 7
        %v395 = vsub.s32 %v392, %v394
        %v396 = vrot.slane %v382, %v395
        %v397 = vcombine.low %v332, %v348
        %v398 = vcombine.high %v332, %v348
        %v400 = vunpack.c.l.s4 1934713408
        %v401 = vunpack.c.0.s8 %v400
        %v402 = vlaneseq
        %v403 = vshrl.u32 %v402, 7
        %v404 = vsub.s32 %v401, %v403
        %v405 = vrot.slane %v397, %v404
        %v407 = vunpack.c.l.s4 1934713408
        %v408 = vunpack.c.0.s8 %v407
        %v409 = vlaneseq
        %v410 = vshrl.u32 %v409, 7
        %v411 = vsub.s32 %v408, %v410
        %v412 = vrot.slane %v398, %v411
        %v413 = vcombine.low %v357, %v389
        %v414 = vcombine.high %v357, %v389
        %v415 = vcombine.low %v364, %v396
        %v416 = vcombine.high %v364, %v396
        %v417 = vcombine.low %v373, %v405
        %v418 = vcombine.high %v373, %v405
        %v419 = vcombine.low %v380, %v412
        %v420 = vcombine.high %v380, %v412
        %v421 = vcombine.low %v218, %v222
        %v422 = vcombine.high %v218, %v222
        %v424 = vunpack.c.l.s4 1983009808
        %v425 = vunpack.c.0.s8 %v424
        %v426 = vlaneseq
        %v427 = vshrl.u32 %v426, 7
        %v428 = vsub.s32 %v425, %v427
        %v429 = vrot.slane %v421, %v428
        %v431 = vunpack.c.l.s4 1983009808
        %v432 = vunpack.c.0.s8 %v431
        %v433 = vlaneseq
        %v434 = vshrl.u32 %v433, 7
        %v435 = vsub.s32 %v432, %v434
        %v436 = vrot.slane %v422, %v435
        %v437 = vcombine.low %v220, %v224
        %v438 = vcombine.high %v220, %v224
        %v440 = vunpack.c.l.s4 1983009808
        %v441 = vunpack.c.0.s8 %v440
        %v442 = vlaneseq
        %v443 = vshrl.u32 %v442, 7
        %v444 = vsub.s32 %v441, %v443
        %v445 = vrot.slane %v437, %v444
        %v447 = vunpack.c.l.s4 1983009808
        %v448 = vunpack.c.0.s8 %v447
        %v449 = vlaneseq
        %v450 = vshrl.u32 %v449, 7
        %v451 = vsub.s32 %v448, %v450
        %v452 = vrot.slane %v438, %v451
        %v453 = vcombine.low %v191, %v193
        %v454 = vcombine.high %v191, %v193
        %v456 = vunpack.c.l.s4 1983009808
        %v457 = vunpack.c.0.s8 %v456
        %v458 = vlaneseq
        %v459 = vshrl.u32 %v458, 7
        %v460 = vsub.s32 %v457, %v459
        %v461 = vrot.slane %v453, %v460
        %v463 = vunpack.c.l.s4 1983009808
        %v464 = vunpack.c.0.s8 %v463
        %v465 = vlaneseq
        %v466 = vshrl.u32 %v465, 7
        %v467 = vsub.s32 %v464, %v466
        %v468 = vrot.slane %v454, %v467
        %v469 = vcombine.low %v192, %v194
        %v470 = vcombine.high %v192, %v194
        %v472 = vunpack.c.l.s4 1983009808
        %v473 = vunpack.c.0.s8 %v472
        %v474 = vlaneseq
        %v475 = vshrl.u32 %v474, 7
        %v476 = vsub.s32 %v473, %v475
        %v477 = vrot.slane %v469, %v476
        %v479 = vunpack.c.l.s4 1983009808
        %v480 = vunpack.c.0.s8 %v479
        %v481 = vlaneseq
        %v482 = vshrl.u32 %v481, 7
        %v483 = vsub.s32 %v480, %v482
        %v484 = vrot.slane %v470, %v483
        %v485 = vcombine.low %v429, %v445
        %v486 = vcombine.high %v429, %v445
        %v488 = vunpack.c.l.s4 1934713408
        %v489 = vunpack.c.0.s8 %v488
        %v490 = vlaneseq
        %v491 = vshrl.u32 %v490, 7
        %v492 = vsub.s32 %v489, %v491
        %v493 = vrot.slane %v485, %v492
        %v495 = vunpack.c.l.s4 1934713408
        %v496 = vunpack.c.0.s8 %v495
        %v497 = vlaneseq
        %v498 = vshrl.u32 %v497, 7
        %v499 = vsub.s32 %v496, %v498
        %v500 = vrot.slane %v486, %v499
        %v501 = vcombine.low %v436, %v452
        %v502 = vcombine.high %v436, %v452
        %v504 = vunpack.c.l.s4 1934713408
        %v505 = vunpack.c.0.s8 %v504
        %v506 = vlaneseq
        %v507 = vshrl.u32 %v506, 7
        %v508 = vsub.s32 %v505, %v507
        %v509 = vrot.slane %v501, %v508
        %v511 = vunpack.c.l.s4 1934713408
        %v512 = vunpack.c.0.s8 %v511
        %v513 = vlaneseq
        %v514 = vshrl.u32 %v513, 7
        %v515 = vsub.s32 %v512, %v514
        %v516 = vrot.slane %v502, %v515
        %v517 = vcombine.low %v461, %v477
        %v518 = vcombine.high %v461, %v477
        %v520 = vunpack.c.l.s4 1934713408
        %v521 = vunpack.c.0.s8 %v520
        %v522 = vlaneseq
        %v523 = vshrl.u32 %v522, 7
        %v524 = vsub.s32 %v521, %v523
        %v525 = vrot.slane %v517, %v524
        %v527 = vunpack.c.l.s4 1934713408
        %v528 = vunpack.c.0.s8 %v527
        %v529 = vlaneseq
        %v530 = vshrl.u32 %v529, 7
        %v531 = vsub.s32 %v528, %v530
        %v532 = vrot.slane %v518, %v531
        %v533 = vcombine.low %v468, %v484
        %v534 = vcombine.high %v468, %v484
        %v536 = vunpack.c.l.s4 1934713408
        %v537 = vunpack.c.0.s8 %v536
        %v538 = vlaneseq
        %v539 = vshrl.u32 %v538, 7
        %v540 = vsub.s32 %v537, %v539
        %v541 = vrot.slane %v533, %v540
        %v543 = vunpack.c.l.s4 1934713408
        %v544 = vunpack.c.0.s8 %v543
        %v545 = vlaneseq
        %v546 = vshrl.u32 %v545, 7
        %v547 = vsub.s32 %v544, %v546
        %v548 = vrot.slane %v534, %v547
        %v549 = vcombine.low %v493, %v525
        %v550 = vcombine.high %v493, %v525
        %v551 = vcombine.low %v500, %v532
        %v552 = vcombine.high %v500, %v532
        %v553 = vcombine.low %v509, %v541
        %v554 = vcombine.high %v509, %v541
        %v555 = vcombine.low %v516, %v548
        %v556 = vcombine.high %v516, %v548
        %v557 = vcombine.low %v234, %v238
        %v558 = vcombine.high %v234, %v238
        %v560 = vunpack.c.l.s4 1983009808
        %v561 = vunpack.c.0.s8 %v560
        %v562 = vlaneseq
        %v563 = vshrl.u32 %v562, 7
        %v564 = vsub.s32 %v561, %v563
        %v565 = vrot.slane %v557, %v564
        %v567 = vunpack.c.l.s4 1983009808
        %v568 = vunpack.c.0.s8 %v567
        %v569 = vlaneseq
        %v570 = vshrl.u32 %v569, 7
        %v571 = vsub.s32 %v568, %v570
        %v572 = vrot.slane %v558, %v571
        %v573 = vcombine.low %v236, %v240
        %v574 = vcombine.high %v236, %v240
        %v576 = vunpack.c.l.s4 1983009808
        %v577 = vunpack.c.0.s8 %v576
        %v578 = vlaneseq
        %v579 = vshrl.u32 %v578, 7
        %v580 = vsub.s32 %v577, %v579
        %v581 = vrot.slane %v573, %v580
        %v583 = vunpack.c.l.s4 1983009808
        %v584 = vunpack.c.0.s8 %v583
        %v585 = vlaneseq
        %v586 = vshrl.u32 %v585, 7
        %v587 = vsub.s32 %v584, %v586
        %v588 = vrot.slane %v574, %v587
        %v589 = vcombine.low %v246, %v250
        %v590 = vcombine.high %v246, %v250
        %v592 = vunpack.c.l.s4 1983009808
        %v593 = vunpack.c.0.s8 %v592
        %v594 = vlaneseq
        %v595 = vshrl.u32 %v594, 7
        %v596 = vsub.s32 %v593, %v595
        %v597 = vrot.slane %v589, %v596
        %v599 = vunpack.c.l.s4 1983009808
        %v600 = vunpack.c.0.s8 %v599
        %v601 = vlaneseq
        %v602 = vshrl.u32 %v601, 7
        %v603 = vsub.s32 %v600, %v602
        %v604 = vrot.slane %v590, %v603
        %v605 = vcombine.low %v248, %v252
        %v606 = vcombine.high %v248, %v252
        %v608 = vunpack.c.l.s4 1983009808
        %v609 = vunpack.c.0.s8 %v608
        %v610 = vlaneseq
        %v611 = vshrl.u32 %v610, 7
        %v612 = vsub.s32 %v609, %v611
        %v613 = vrot.slane %v605, %v612
        %v615 = vunpack.c.l.s4 1983009808
        %v616 = vunpack.c.0.s8 %v615
        %v617 = vlaneseq
        %v618 = vshrl.u32 %v617, 7
        %v619 = vsub.s32 %v616, %v618
        %v620 = vrot.slane %v606, %v619
        %v621 = vcombine.low %v565, %v581
        %v622 = vcombine.high %v565, %v581
        %v624 = vunpack.c.l.s4 1934713408
        %v625 = vunpack.c.0.s8 %v624
        %v626 = vlaneseq
        %v627 = vshrl.u32 %v626, 7
        %v628 = vsub.s32 %v625, %v627
        %v629 = vrot.slane %v621, %v628
        %v631 = vunpack.c.l.s4 1934713408
        %v632 = vunpack.c.0.s8 %v631
        %v633 = vlaneseq
        %v634 = vshrl.u32 %v633, 7
        %v635 = vsub.s32 %v632, %v634
        %v636 = vrot.slane %v622, %v635
        %v637 = vcombine.low %v572, %v588
        %v638 = vcombine.high %v572, %v588
        %v640 = vunpack.c.l.s4 1934713408
        %v641 = vunpack.c.0.s8 %v640
        %v642 = vlaneseq
        %v643 = vshrl.u32 %v642, 7
        %v644 = vsub.s32 %v641, %v643
        %v645 = vrot.slane %v637, %v644
        %v647 = vunpack.c.l.s4 1934713408
        %v648 = vunpack.c.0.s8 %v647
        %v649 = vlaneseq
        %v650 = vshrl.u32 %v649, 7
        %v651 = vsub.s32 %v648, %v650
        %v652 = vrot.slane %v638, %v651
        %v653 = vcombine.low %v597, %v613
        %v654 = vcombine.high %v597, %v613
        %v656 = vunpack.c.l.s4 1934713408
        %v657 = vunpack.c.0.s8 %v656
        %v658 = vlaneseq
        %v659 = vshrl.u32 %v658, 7
        %v660 = vsub.s32 %v657, %v659
        %v661 = vrot.slane %v653, %v660
        %v663 = vunpack.c.l.s4 1934713408
        %v664 = vunpack.c.0.s8 %v663
        %v665 = vlaneseq
        %v666 = vshrl.u32 %v665, 7
        %v667 = vsub.s32 %v664, %v666
        %v668 = vrot.slane %v654, %v667
        %v669 = vcombine.low %v604, %v620
        %v670 = vcombine.high %v604, %v620
        %v672 = vunpack.c.l.s4 1934713408
        %v673 = vunpack.c.0.s8 %v672
        %v674 = vlaneseq
        %v675 = vshrl.u32 %v674, 7
        %v676 = vsub.s32 %v673, %v675
        %v677 = vrot.slane %v669, %v676
        %v679 = vunpack.c.l.s4 1934713408
        %v680 = vunpack.c.0.s8 %v679
        %v681 = vlaneseq
        %v682 = vshrl.u32 %v681, 7
        %v683 = vsub.s32 %v680, %v682
        %v684 = vrot.slane %v670, %v683
        %v685 = vcombine.low %v629, %v661
        %v686 = vcombine.high %v629, %v661
        %v687 = vcombine.low %v636, %v668
        %v688 = vcombine.high %v636, %v668
        %v689 = vcombine.low %v645, %v677
        %v690 = vcombine.high %v645, %v677
        %v691 = vcombine.low %v652, %v684
        %v692 = vcombine.high %v652, %v684
        %v693 = vcombine.low %v197, %v199
        %v694 = vcombine.high %v197, %v199
        %v696 = vunpack.c.l.s4 1983009808
        %v697 = vunpack.c.0.s8 %v696
        %v698 = vlaneseq
        %v699 = vshrl.u32 %v698, 7
        %v700 = vsub.s32 %v697, %v699
        %v701 = vrot.slane %v693, %v700
        %v703 = vunpack.c.l.s4 1983009808
        %v704 = vunpack.c.0.s8 %v703
        %v705 = vlaneseq
        %v706 = vshrl.u32 %v705, 7
        %v707 = vsub.s32 %v704, %v706
        %v708 = vrot.slane %v694, %v707
        %v709 = vcombine.low %v198, %v200
        %v710 = vcombine.high %v198, %v200
        %v712 = vunpack.c.l.s4 1983009808
        %v713 = vunpack.c.0.s8 %v712
        %v714 = vlaneseq
        %v715 = vshrl.u32 %v714, 7
        %v716 = vsub.s32 %v713, %v715
        %v717 = vrot.slane %v709, %v716
        %v719 = vunpack.c.l.s4 1983009808
        %v720 = vunpack.c.0.s8 %v719
        %v721 = vlaneseq
        %v722 = vshrl.u32 %v721, 7
        %v723 = vsub.s32 %v720, %v722
        %v724 = vrot.slane %v710, %v723
        %v725 = vcombine.low %v262, %v266
        %v726 = vcombine.high %v262, %v266
        %v728 = vunpack.c.l.s4 1983009808
        %v729 = vunpack.c.0.s8 %v728
        %v730 = vlaneseq
        %v731 = vshrl.u32 %v730, 7
        %v732 = vsub.s32 %v729, %v731
        %v733 = vrot.slane %v725, %v732
        %v735 = vunpack.c.l.s4 1983009808
        %v736 = vunpack.c.0.s8 %v735
        %v737 = vlaneseq
        %v738 = vshrl.u32 %v737, 7
        %v739 = vsub.s32 %v736, %v738
        %v740 = vrot.slane %v726, %v739
        %v741 = vcombine.low %v264, %v268
        %v742 = vcombine.high %v264, %v268
        %v744 = vunpack.c.l.s4 1983009808
        %v745 = vunpack.c.0.s8 %v744
        %v746 = vlaneseq
        %v747 = vshrl.u32 %v746, 7
        %v748 = vsub.s32 %v745, %v747
        %v749 = vrot.slane %v741, %v748
        %v751 = vunpack.c.l.s4 1983009808
        %v752 = vunpack.c.0.s8 %v751
        %v753 = vlaneseq
        %v754 = vshrl.u32 %v753, 7
        %v755 = vsub.s32 %v752, %v754
        %v756 = vrot.slane %v742, %v755
        %v757 = vcombine.low %v701, %v717
        %v758 = vcombine.high %v701, %v717
        %v760 = vunpack.c.l.s4 1934713408
        %v761 = vunpack.c.0.s8 %v760
        %v762 = vlaneseq
        %v763 = vshrl.u32 %v762, 7
        %v764 = vsub.s32 %v761, %v763
        %v765 = vrot.slane %v757, %v764
        %v767 = vunpack.c.l.s4 1934713408
        %v768 = vunpack.c.0.s8 %v767
        %v769 = vlaneseq
        %v770 = vshrl.u32 %v769, 7
        %v771 = vsub.s32 %v768, %v770
        %v772 = vrot.slane %v758, %v771
        %v773 = vcombine.low %v708, %v724
        %v774 = vcombine.high %v708, %v724
        %v776 = vunpack.c.l.s4 1934713408
        %v777 = vunpack.c.0.s8 %v776
        %v778 = vlaneseq
        %v779 = vshrl.u32 %v778, 7
        %v780 = vsub.s32 %v777, %v779
        %v781 = vrot.slane %v773, %v780
        %v783 = vunpack.c.l.s4 1934713408
        %v784 = vunpack.c.0.s8 %v783
        %v785 = vlaneseq
        %v786 = vshrl.u32 %v785, 7
        %v787 = vsub.s32 %v784, %v786
        %v788 = vrot.slane %v774, %v787
        %v789 = vcombine.low %v733, %v749
        %v790 = vcombine.high %v733, %v749
        %v792 = vunpack.c.l.s4 1934713408
        %v793 = vunpack.c.0.s8 %v792
        %v794 = vlaneseq
        %v795 = vshrl.u32 %v794, 7
        %v796 = vsub.s32 %v793, %v795
        %v797 = vrot.slane %v789, %v796
        %v799 = vunpack.c.l.s4 1934713408
        %v800 = vunpack.c.0.s8 %v799
        %v801 = vlaneseq
        %v802 = vshrl.u32 %v801, 7
        %v803 = vsub.s32 %v800, %v802
        %v804 = vrot.slane %v790, %v803
        %v805 = vcombine.low %v740, %v756
        %v806 = vcombine.high %v740, %v756
        %v808 = vunpack.c.l.s4 1934713408
        %v809 = vunpack.c.0.s8 %v808
        %v810 = vlaneseq
        %v811 = vshrl.u32 %v810, 7
        %v812 = vsub.s32 %v809, %v811
        %v813 = vrot.slane %v805, %v812
        %v815 = vunpack.c.l.s4 1934713408
        %v816 = vunpack.c.0.s8 %v815
        %v817 = vlaneseq
        %v818 = vshrl.u32 %v817, 7
        %v819 = vsub.s32 %v816, %v818
        %v820 = vrot.slane %v806, %v819
        %v821 = vcombine.low %v765, %v797
        %v822 = vcombine.high %v765, %v797
        %v823 = vcombine.low %v772, %v804
        %v824 = vcombine.high %v772, %v804
        %v825 = vcombine.low %v781, %v813
        %v826 = vcombine.high %v781, %v813
        %v827 = vcombine.low %v788, %v820
        %v828 = vcombine.high %v788, %v820
        %v829 = vcombine.low %v274, %v278
        %v830 = vcombine.high %v274, %v278
        %v832 = vunpack.c.l.s4 1983009808
        %v833 = vunpack.c.0.s8 %v832
        %v834 = vlaneseq
        %v835 = vshrl.u32 %v834, 7
        %v836 = vsub.s32 %v833, %v835
        %v837 = vrot.slane %v829, %v836
        %v839 = vunpack.c.l.s4 1983009808
        %v840 = vunpack.c.0.s8 %v839
        %v841 = vlaneseq
        %v842 = vshrl.u32 %v841, 7
        %v843 = vsub.s32 %v840, %v842
        %v844 = vrot.slane %v830, %v843
        %v845 = vcombine.low %v276, %v280
        %v846 = vcombine.high %v276, %v280
        %v848 = vunpack.c.l.s4 1983009808
        %v849 = vunpack.c.0.s8 %v848
        %v850 = vlaneseq
        %v851 = vshrl.u32 %v850, 7
        %v852 = vsub.s32 %v849, %v851
        %v853 = vrot.slane %v845, %v852
        %v855 = vunpack.c.l.s4 1983009808
        %v856 = vunpack.c.0.s8 %v855
        %v857 = vlaneseq
        %v858 = vshrl.u32 %v857, 7
        %v859 = vsub.s32 %v856, %v858
        %v860 = vrot.slane %v846, %v859
        %v861 = vcombine.low %v837, %v853
        %v862 = vcombine.high %v837, %v853
        %v864 = vunpack.c.l.s4 1934713408
        %v865 = vunpack.c.0.s8 %v864
        %v866 = vlaneseq
        %v867 = vshrl.u32 %v866, 7
        %v868 = vsub.s32 %v865, %v867
        %v869 = vrot.slane %v861, %v868
        %v871 = vunpack.c.l.s4 1934713408
        %v872 = vunpack.c.0.s8 %v871
        %v873 = vlaneseq
        %v874 = vshrl.u32 %v873, 7
        %v875 = vsub.s32 %v872, %v874
        %v876 = vrot.slane %v862, %v875
        %v877 = vcombine.low %v844, %v860
        %v878 = vcombine.high %v844, %v860
        %v880 = vunpack.c.l.s4 1934713408
        %v881 = vunpack.c.0.s8 %v880
        %v882 = vlaneseq
        %v883 = vshrl.u32 %v882, 7
        %v884 = vsub.s32 %v881, %v883
        %v885 = vrot.slane %v877, %v884
        %v887 = vunpack.c.l.s4 1934713408
        %v888 = vunpack.c.0.s8 %v887
        %v889 = vlaneseq
        %v890 = vshrl.u32 %v889, 7
        %v891 = vsub.s32 %v888, %v890
        %v892 = vrot.slane %v878, %v891
        %v893 = vcombine.high %v869, 0.0
        %v894 = vcombine.high %v876, 0.0
        %v895 = vcombine.high %v885, 0.0
        %v896 = vcombine.high %v892, 0.0
        %902 = vrot.lane.b32.xlu0 %v414, 16
        %v903 = vpop.permute.xlu0 %902
        %904 = vrot.lane.b32.xlu0 %v550, 16
        %v905 = vpop.permute.xlu0 %904
        %906 = vrot.lane.b32.xlu0 %v686, 16
        %v907 = vpop.permute.xlu0 %906
        %908 = vrot.lane.b32.xlu0 %v822, 16
        %v909 = vpop.permute.xlu0 %908
        %910 = vrot.lane.b32.xlu0 %v893, 16
        %v911 = vpop.permute.xlu0 %910
        %922 = vrot.lane.b32.xlu0 %v415, 32
        %v923 = vpop.permute.xlu0 %922
        %924 = vrot.lane.b32.xlu0 %v551, 32
        %v925 = vpop.permute.xlu0 %924
        %926 = vrot.lane.b32.xlu0 %v687, 32
        %v927 = vpop.permute.xlu0 %926
        %928 = vrot.lane.b32.xlu0 %v823, 32
        %v929 = vpop.permute.xlu0 %928
        %930 = vrot.lane.b32.xlu0 %v876, 32
        %v931 = vpop.permute.xlu0 %930
        %942 = vrot.lane.b32.xlu0 %v416, 48
        %v943 = vpop.permute.xlu0 %942
        %944 = vrot.lane.b32.xlu0 %v552, 48
        %v945 = vpop.permute.xlu0 %944
        %946 = vrot.lane.b32.xlu0 %v688, 48
        %v947 = vpop.permute.xlu0 %946
        %948 = vrot.lane.b32.xlu0 %v824, 48
        %v949 = vpop.permute.xlu0 %948
        %950 = vrot.lane.b32.xlu0 %v894, 48
        %v951 = vpop.permute.xlu0 %950
        %962 = vrot.lane.b32.xlu0 %v417, 64
        %v963 = vpop.permute.xlu0 %962
        %964 = vrot.lane.b32.xlu0 %v553, 64
        %v965 = vpop.permute.xlu0 %964
        %966 = vrot.lane.b32.xlu0 %v689, 64
        %v967 = vpop.permute.xlu0 %966
        %968 = vrot.lane.b32.xlu0 %v825, 64
        %v969 = vpop.permute.xlu0 %968
        %970 = vrot.lane.b32.xlu0 %v885, 64
        %v971 = vpop.permute.xlu0 %970
        %982 = vrot.lane.b32.xlu0 %v418, 80
        %v983 = vpop.permute.xlu0 %982
        %984 = vrot.lane.b32.xlu0 %v554, 80
        %v985 = vpop.permute.xlu0 %984
        %986 = vrot.lane.b32.xlu0 %v690, 80
        %v987 = vpop.permute.xlu0 %986
        %988 = vrot.lane.b32.xlu0 %v826, 80
        %v989 = vpop.permute.xlu0 %988
        %990 = vrot.lane.b32.xlu0 %v895, 80
        %v991 = vpop.permute.xlu0 %990
        %1002 = vrot.lane.b32.xlu0 %v419, 96
        %v1003 = vpop.permute.xlu0 %1002
        %1004 = vrot.lane.b32.xlu0 %v555, 96
        %v1005 = vpop.permute.xlu0 %1004
        %1006 = vrot.lane.b32.xlu0 %v691, 96
        %v1007 = vpop.permute.xlu0 %1006
        %1008 = vrot.lane.b32.xlu0 %v827, 96
        %v1009 = vpop.permute.xlu0 %1008
        %1010 = vrot.lane.b32.xlu0 %v892, 96
        %v1011 = vpop.permute.xlu0 %1010
        %1022 = vrot.lane.b32.xlu0 %v420, 112
        %v1023 = vpop.permute.xlu0 %1022
        %1024 = vrot.lane.b32.xlu0 %v556, 112
        %v1025 = vpop.permute.xlu0 %1024
        %1026 = vrot.lane.b32.xlu0 %v692, 112
        %v1027 = vpop.permute.xlu0 %1026
        %1028 = vrot.lane.b32.xlu0 %v828, 112
        %v1029 = vpop.permute.xlu0 %1028
        %1030 = vrot.lane.b32.xlu0 %v896, 112
        %v1031 = vpop.permute.xlu0 %1030
        %vm1037 = vcmask 130048
        %v1038 = vsel %vm1037, %v413, %v903
        %v1039 = vsel %vm1037, %v549, %v905
        %v1040 = vsel %vm1037, %v685, %v907
        %v1041 = vsel %vm1037, %v821, %v909
        %v1042 = vsel %vm1037, %v869, %v911
        %vm1043 = vcmask 261120
        %v1044 = vsel %vm1043, %v1038, %v923
        %v1045 = vsel %vm1043, %v1039, %v925
        %v1046 = vsel %vm1043, %v1040, %v927
        %v1047 = vsel %vm1043, %v1041, %v929
        %v1048 = vsel %vm1043, %v1042, %v931
        %vm1049 = vcmask 392192
        %v1050 = vsel %vm1049, %v1044, %v943
        %v1051 = vsel %vm1049, %v1045, %v945
        %v1052 = vsel %vm1049, %v1046, %v947
        %v1053 = vsel %vm1049, %v1047, %v949
        %v1054 = vsel %vm1049, %v1048, %v951
        %vm1055 = vcmask 523264
        %v1056 = vsel %vm1055, %v1050, %v963
        %v1057 = vsel %vm1055, %v1051, %v965
        %v1058 = vsel %vm1055, %v1052, %v967
        %v1059 = vsel %vm1055, %v1053, %v969
        %v1060 = vsel %vm1055, %v1054, %v971
        %vm1061 = vcmask 654336
        %v1062 = vsel %vm1061, %v1056, %v983
        %v1063 = vsel %vm1061, %v1057, %v985
        %v1064 = vsel %vm1061, %v1058, %v987
        %v1065 = vsel %vm1061, %v1059, %v989
        %v1066 = vsel %vm1061, %v1060, %v991
        %vm1067 = vcmask 785408
        %v1068 = vsel %vm1067, %v1062, %v1003
        %v1069 = vsel %vm1067, %v1063, %v1005
        %v1070 = vsel %vm1067, %v1064, %v1007
        %v1071 = vsel %vm1067, %v1065, %v1009
        %v1072 = vsel %vm1067, %v1066, %v1011
        %vm1073 = vcmask 916480
        %v1074 = vsel %vm1073, %v1068, %v1023
        %v1075 = vsel %vm1073, %v1069, %v1025
        %v1076 = vsel %vm1073, %v1070, %v1027
        %v1077 = vsel %vm1073, %v1071, %v1029
        %v1078 = vsel %vm1073, %v1072, %v1031
        %v1079 = vld [vmem:[%s1] sm:$0xff]
        %v1080 = vld [vmem:[%s2] sm:$0xff]
        %1082 = vset.pattern.permute.xlu0 0
        %1083 = vperm.xlu0 %1082, %v1080
        %v1084 = vpop.permute.xlu0 %1083
        %vm1086 = vcmask 293888
        %v1088 = vsel %vm1086, %v1079, 0
        %vm1090 = vcmask 1043456
        %v1092 = vsel %vm1090, %v1078, 0
        %1094 = vmatprep.subr.mxu0 0.0
        %1095 = vmatpush1.msra.mxu0 %v1074
        %1096 = vmatprep.subr.mxu0 0.0
        %1097 = vmatpush1.msra.mxu0 %v1075
        %1098 = vmatprep.subr.mxu0 0.0
        %1099 = vmatpush1.msra.mxu0 %v1076
        %1100 = vmatprep.subr.mxu0 0.0
        %1101 = vmatpush1.msra.mxu0 %v1077
        %1102 = vmatprep.subr.mxu0 0.0
        %1103 = vmatpush1.msra.mxu0 %v1092
        %1104 = vmatprep.subr.mxu0 0.0
        %1105 = vmatpush1.msra.mxu0 0.0
        %1106 = vmatprep.subr.mxu0 0.0
        %1107 = vmatpush1.msra.mxu0 0.0
        %1108 = vmatprep.subr.mxu0 0.0
        %1109 = vmatpush1.msra.mxu0 0.0
        %1110 = vmatprep.subr.mxu0 0.0
        %1111 = vmatpush1.msra.mxu0 0.0
        %1112 = vmatprep.subr.mxu0 0.0
        %1113 = vmatpush1.msra.mxu0 0.0
        %1114 = vmatprep.subr.mxu0 0.0
        %1115 = vmatpush1.msra.mxu0 0.0
        %1116 = vmatprep.subr.mxu0 0.0
        %1117 = vmatpush1.msra.mxu0 0.0
        %1118 = vmatprep.subr.mxu0 0.0
        %1119 = vmatpush1.msra.mxu0 0.0
        %1120 = vmatprep.subr.mxu0 0.0
        %1121 = vmatpush1.msra.mxu0 0.0
        %1122 = vmatprep.subr.mxu0 0.0
        %1123 = vmatpush1.msra.mxu0 0.0
        %1124 = vmatprep.subr.mxu0 0.0
        %1125 = vmatpush1.msra.mxu0 0.0
        %1126 = vmatprep.subr.mxu0 0.0
        %1127 = vmatpush1.msra.mxu0 0.0
        %1128 = vmatprep.subr.mxu0 0.0
        %1129 = vmatpush1.msra.mxu0 0.0
        %1130 = vmatprep.subr.mxu0 0.0
        %1131 = vmatpush1.msra.mxu0 0.0
        %1132 = vmatprep.subr.mxu0 0.0
        %1133 = vmatpush1.msra.mxu0 0.0
        %1134 = vmatprep.subr.mxu0 0.0
        %1135 = vmatpush1.msra.mxu0 0.0
        %1136 = vmatprep.subr.mxu0 0.0
        %1137 = vmatpush1.msra.mxu0 0.0
        %1138 = vmatprep.subr.mxu0 0.0
        %1139 = vmatpush1.msra.mxu0 0.0
        %1140 = vmatprep.subr.mxu0 0.0
        %1141 = vmatpush1.msra.mxu0 0.0
        %1142 = vmatprep.subr.mxu0 0.0
        %1143 = vmatpush1.msra.mxu0 0.0
        %1144 = vmatprep.subr.mxu0 0.0
        %1145 = vmatpush1.msra.mxu0 0.0
        %1146 = vmatprep.subr.mxu0 0.0
        %1147 = vmatpush1.msra.mxu0 0.0
        %1148 = vmatprep.subr.mxu0 0.0
        %1149 = vmatpush1.msra.mxu0 0.0
        %1150 = vmatprep.subr.mxu0 0.0
        %1151 = vmatpush1.msra.mxu0 0.0
        %1152 = vmatprep.subr.mxu0 0.0
        %1153 = vmatpush1.msra.mxu0 0.0
        %1154 = vmatprep.subr.mxu0 0.0
        %1155 = vmatpush1.msra.mxu0 0.0
        %1156 = vmatprep.subr.mxu0 0.0
        %1157 = vmatpush1.msra.mxu0 0.0
        %1158 = vmatprep.mubr.f32.mxu0 0.0
        %1159 = vmatmul.mubr.f32.gmra.mrb[0].mxu0 %v1088
        %v1160 = vpop.f32.mrb[0].mxu0
        %v1161 = vadd.f32 %v1084, %v1160
        %v1162 = vpop.f32.mrb[0].mxu0
        %1163 = vdwg.mxu0
        %1164 = vst [vmem:[%s177] sm:$0xff] %v1161
        %s1165 = sand.u32 %s107, 1
        %s1166 = scalar_lea.sflag [#allocation3], %s1165
        %s1167 = sand.u32 %s107, 1
        %s1168 = smul.addr %s1167, 8
        %s1169 = scalar_lea.vmem [#allocation2], %s1168
        // Predicated region
        $region33: #{tpu_custom_call.1} parent=31 // pred_check
          %p1170 = pneg %p117
        $region34: #{tpu_custom_call.1} parent=31 // pred_check_branch
          %1172 = sbr.rel (%p1170) target = $region36
        $region35: #{tpu_custom_call.1} parent=31 // pred_region
          %s1174 = ssub.s32 128, 128
          %1175 = vsyncadd %s1166, %s1174
          %s1176 = smul.addr %s21, 2
          %s1177 = sadd.s32 %s22, %s1176
          %s1178 = smul.addr %s1177, 128
          %s1179 = scalar_lea.hbm %s3, %s1178
          %s1181 = sshll.u32 %s1169, 4
          %s1182 = int_to_ptr.vmem [resolvable:$true] %s1181
          %1184 = dma.vmem_to_hbm [thread:$0]  %s1182, 128, %s1179, %s1166
        $region36: #{tpu_custom_call.1} parent=31 // pred_fallthru
          _
      $region32: #{tpu_custom_call.1} parent=5 // pred_fallthru
        _
      %p1185 = scmp.le.s32.totalorder 2, %s12
      // Predicated region
      $region37: #{tpu_custom_call.1} parent=5 // pred_check
        %p1186 = pneg %p1185
      $region38: #{tpu_custom_call.1} parent=5 // pred_check_branch
        %1188 = sbr.rel (%p1186) target = $region40
      $region39: #{tpu_custom_call.1} parent=5 // pred_region
        %s1189 = ssub.s32 %s12, 2
        // Predicated region
        $region41: #{tpu_custom_call.1} parent=39 // pred_check
          %p1190 = pneg %p123
        $region42: #{tpu_custom_call.1} parent=39 // pred_check_branch
          %1192 = sbr.rel (%p1190) target = $region44
        $region43: #{tpu_custom_call.1} parent=39 // pred_region
          %s1193 = sand.u32 %s108, 1
          %s1194 = scalar_lea.sflag [#allocation3], %s1193
          %s1195 = sand.u32 %s108, 1
          %s1196 = smul.addr %s1195, 8
          %s1197 = scalar_lea.vmem [#allocation2], %s1196
          %1198 = dma.done %s1194, 128
        $region44: #{tpu_custom_call.1} parent=39 // pred_fallthru
          _
      $region40: #{tpu_custom_call.1} parent=5 // pred_fallthru
        _
    $region6: #{tpu_custom_call.1} parent=1 // loop_footer
      %s16 = sadd.s32 1, %s12
    $region7: #{tpu_custom_call.1} parent=1 // loop_footer_branch
      %11 = sbr.rel target = $region3
    $region8: #{tpu_custom_call.1} parent=1 // loop_exit
      _
    %1199 = vsyncpa [#allocation3], 1
    %s1200 = scalar_lea.sflag [#allocation3], 1
    %1201 = vsyncpa %s1200, 1

</llo_original>
